<compile_context>
chip_gen: v6e
topology: v6e:2x2x1
jax: 0.10.0
libtpu: 0.0.40
codegen_flags: <defaults>
</compile_context>

<pallas_src>
import functools

import jax
import jax.numpy as jnp
from jax.experimental import pallas as pl
from jax.experimental.pallas import tpu as pltpu


def _round_up(x, m):
    return ((x + m - 1) // m) * m


def _act_dtype_for_device():
    """bf16 bias-add/tanh on v6e/v7x; f32 on v5e (no bf16 VPU/EUP there)."""
    try:
        kind = jax.devices()[0].device_kind.lower()
    except Exception:
        kind = ""
    return jnp.float32 if "v5" in kind else jnp.bfloat16


def _head_kernel(x_ref, w1_ref, b1_ref, w2_ref, b2_ref, o_ref, *, act_dtype):
    # x_ref:  [tb, H]   compute-dtype CLS-token features (seq dim squeezed or pre-sliced)
    # w1_ref: [H, H]    compute-dtype linear weight, stored [in, out]
    # b1_ref: [1, H]    f32
    # w2_ref: [H, Lp]   compute-dtype out_proj weight, stored [in, out], lane-padded
    # b2_ref: [1, Lp]   f32, lane-padded
    # o_ref:  [tb, Lp]  f32 logits (lane-padded; wrapper slices back to L)
    x = x_ref[...]                                      # keep bf16 for the MXU
    # dropout (eval) == identity
    h = jnp.dot(x, w1_ref[...], preferred_element_type=jnp.float32)
    h = jnp.tanh((h + b1_ref[...]).astype(act_dtype))   # task_type == 'classification'
    # dropout (eval) == identity
    out = jnp.dot(h.astype(w2_ref.dtype), w2_ref[...],
                  preferred_element_type=jnp.float32) + b2_ref[...]
    o_ref[...] = out.astype(o_ref.dtype)


def roberta_classification_head(features, w1, b1, w2, b2, *,
                                compute_dtype=jnp.bfloat16,
                                block_b=1024,
                                act_dtype=None):
    """features: [B, S, H]; w1: [H, H]; w2: [H, L] (both stored [in, out]).

    Returns f32 logits [B, L].  NOTE: torch nn.Linear stores weights as
    [out, in]; transpose when loading real checkpoints.
    """
    B, S, H = features.shape
    L = w2.shape[1]
    Lp = _round_up(max(L, 128), 128)          # lane-dense logits tile
    if act_dtype is None:
        act_dtype = _act_dtype_for_device()

    # ---- batch tile --------------------------------------------------------
    tb = min(block_b, B)
    # Give v7x's two TensorCores a grid step each when the batch is large
    # enough that per-core activation bytes dwarf the W1 re-DMA; harmless
    # (one extra ~0.35us step) on single-TC v5e/v6e.
    if tb == B and B >= max(512, 4 * H):
        tb = min(B, _round_up(pl.cdiv(B, 2), 16))

    # ---- activations: never touch the full [B, S, H] tensor ----------------
    if features.dtype == compute_dtype and B % tb == 0:
        # Zero-copy path: strided DMA of features[:, 0, :] inside the kernel.
        x_in = features
        Bp = B
        x_spec = pl.BlockSpec((tb, None, H), lambda i: (i, 0, 0))
    else:
        # Cast/pad only the [B, H] CLS slice (B*H elements, not B*S*H).
        x2d = features[:, 0, :].astype(compute_dtype)
        pad = (-B) % tb
        if pad:
            x2d = jnp.pad(x2d, ((0, pad), (0, 0)))
        Bp = B + pad
        x_in = x2d
        x_spec = pl.BlockSpec((tb, H), lambda i: (i, 0))

    # ---- weights / biases (VMEM-resident, single-buffered) -----------------
    w1c = w1 if w1.dtype == compute_dtype else w1.astype(compute_dtype)
    w2c = w2 if w2.dtype == compute_dtype else w2.astype(compute_dtype)
    if Lp != L:
        w2c = jnp.pad(w2c, ((0, 0), (0, Lp - L)))
    b1_2d = b1.reshape(1, H).astype(jnp.float32)
    b2_2d = b2.reshape(1, L).astype(jnp.float32)
    if Lp != L:
        b2_2d = jnp.pad(b2_2d, ((0, 0), (0, Lp - L)))

    def _resident(shape):
        # Constant index_map -> fetched once, stays in VMEM; single buffer.
        return pl.BlockSpec(shape, lambda i: (0, 0),
                            pipeline_mode=pl.Buffered(1))

    out = pl.pallas_call(
        functools.partial(_head_kernel, act_dtype=act_dtype),
        out_shape=jax.ShapeDtypeStruct((Bp, Lp), jnp.float32),
        grid=(Bp // tb,),
        in_specs=[
            x_spec,
            _resident((H, H)),
            _resident((1, H)),
            _resident((H, Lp)),
            _resident((1, Lp)),
        ],
        out_specs=pl.BlockSpec((tb, Lp), lambda i: (i, 0)),
        compiler_params=pltpu.CompilerParams(
            dimension_semantics=("parallel",)),
    )(x_in, w1c, b1_2d, w2c, b2_2d)

    return out[:B, :L]


def init_params(key, hidden_size, num_labels):
    """Deterministic nn.Linear-style init (uniform +-1/sqrt(fan_in))."""
    k1, k2, k3, k4 = jax.random.split(key, 4)
    bound = 1.0 / (hidden_size ** 0.5)
    # Weights stored already transposed: [in, out].
    w1 = jax.random.uniform(k1, (hidden_size, hidden_size), jnp.float32,
                            -bound, bound)
    b1 = jax.random.uniform(k2, (hidden_size,), jnp.float32, -bound, bound)
    w2 = jax.random.uniform(k3, (hidden_size, num_labels), jnp.float32,
                            -bound, bound)
    b2 = jax.random.uniform(k4, (num_labels,), jnp.float32, -bound, bound)
    return w1, b1, w2, b2


if __name__ == "__main__":
    B, S, H, num_labels = 2, 8, 32, 4

    key = jax.random.PRNGKey(0)
    k_feat, k_params = jax.random.split(key)
    features = jax.random.normal(k_feat, (B, S, H), jnp.float32)
    w1, b1, w2, b2 = init_params(k_params, H, num_labels)

    out = roberta_classification_head(features, w1, b1, w2, b2)
    out = jax.block_until_ready(out)

    # Reference in plain JAX, mirroring the kernel's compute dtypes
    # (bf16 matmul operands, f32 accumulation, device-dependent act dtype;
    #  dropout == identity in eval).
    act_dtype = _act_dtype_for_device()
    xb = features[:, 0, :].astype(jnp.bfloat16)
    h_ref = jnp.dot(xb, w1.astype(jnp.bfloat16),
                    preferred_element_type=jnp.float32) + b1
    h_ref = jnp.tanh(h_ref.astype(act_dtype))
    ref = jnp.dot(h_ref.astype(jnp.bfloat16), w2.astype(jnp.bfloat16),
                  preferred_element_type=jnp.float32) + b2

    assert out.shape == (B, num_labels)
    assert out.dtype == jnp.float32
    assert jnp.allclose(out, ref, atol=2e-2, rtol=2e-2)

    print("KERNEL_OK")
</pallas_src>

<mosaic_0001>
module attributes {stable_mosaic.version = 11 : i64} {
  func.func @_head_kernel(%arg0: i32, %arg1: memref<2x32xbf16, #tpu.memory_space<vmem>>, %arg2: memref<32x32xbf16, #tpu.memory_space<vmem>>, %arg3: memref<1x32xf32, #tpu.memory_space<vmem>>, %arg4: memref<32x128xbf16, #tpu.memory_space<vmem>>, %arg5: memref<1x128xf32, #tpu.memory_space<vmem>>, %arg6: memref<2x128xf32, #tpu.memory_space<vmem>>) attributes {dimension_semantics = [#tpu.dimension_semantics<parallel>], iteration_bounds = array<i64: 1>, scalar_prefetch = 0 : i64, scratch_operands = 0 : i64, tpu.core_type = #tpu.core_type<tc>, window_params = [{transform_indices = @transform_0, window_bounds = array<i64: 2, 32>}, {pipeline_mode = #tpu.pipeline_mode<synchronous>, transform_indices = @transform_1, window_bounds = array<i64: 32, 32>}, {pipeline_mode = #tpu.pipeline_mode<synchronous>, transform_indices = @transform_2, window_bounds = array<i64: 1, 32>}, {pipeline_mode = #tpu.pipeline_mode<synchronous>, transform_indices = @transform_3, window_bounds = array<i64: 32, 128>}, {pipeline_mode = #tpu.pipeline_mode<synchronous>, transform_indices = @transform_4, window_bounds = array<i64: 1, 128>}, {transform_indices = @transform_5, window_bounds = array<i64: 2, 128>}]} {
    %c0 = arith.constant 0 : index
    %c0_0 = arith.constant 0 : index
    %0 = vector.load %arg1[%c0, %c0_0] : memref<2x32xbf16, #tpu.memory_space<vmem>>, vector<2x32xbf16>
    %c0_1 = arith.constant 0 : index
    %c0_2 = arith.constant 0 : index
    %1 = vector.load %arg2[%c0_1, %c0_2] : memref<32x32xbf16, #tpu.memory_space<vmem>>, vector<32x32xbf16>
    %cst = arith.constant dense<0.000000e+00> : vector<2x32xf32>
    %2 = tpu.matmul %0, %1, %cst {dimension_numbers = #tpu.dot_dimension_numbers<[1], [0], [0], [1], [0, 0, 1, 1], [], []>} : vector<2x32xbf16>, vector<32x32xbf16>, vector<2x32xf32> -> vector<2x32xf32>
    %c0_3 = arith.constant 0 : index
    %c0_4 = arith.constant 0 : index
    %3 = vector.load %arg3[%c0_3, %c0_4] : memref<1x32xf32, #tpu.memory_space<vmem>>, vector<1x32xf32>
    %4 = vector.broadcast %3 : vector<1x32xf32> to vector<2x32xf32>
    %5 = arith.addf %2, %4 : vector<2x32xf32>
    %6 = arith.truncf %5 : vector<2x32xf32> to vector<2x32xbf16>
    %7 = math.tanh %6 : vector<2x32xbf16>
    %c0_5 = arith.constant 0 : index
    %c0_6 = arith.constant 0 : index
    %8 = vector.load %arg4[%c0_5, %c0_6] : memref<32x128xbf16, #tpu.memory_space<vmem>>, vector<32x128xbf16>
    %cst_7 = arith.constant dense<0.000000e+00> : vector<2x128xf32>
    %9 = tpu.matmul %7, %8, %cst_7 {dimension_numbers = #tpu.dot_dimension_numbers<[1], [0], [0], [1], [0, 0, 1, 1], [], []>} : vector<2x32xbf16>, vector<32x128xbf16>, vector<2x128xf32> -> vector<2x128xf32>
    %c0_8 = arith.constant 0 : index
    %c0_9 = arith.constant 0 : index
    %10 = vector.load %arg5[%c0_8, %c0_9] : memref<1x128xf32, #tpu.memory_space<vmem>>, vector<1x128xf32>
    %11 = vector.broadcast %10 : vector<1x128xf32> to vector<2x128xf32>
    %12 = arith.addf %9, %11 : vector<2x128xf32>
    %c0_10 = arith.constant 0 : index
    %c0_11 = arith.constant 0 : index
    %13 = vector.load %arg6[%c0_10, %c0_11] : memref<2x128xf32, #tpu.memory_space<vmem>>, vector<2x128xf32>
    tpu.vector_store %arg6[%c0_10, %c0_11], %12 {strides = array<i32>} : memref<2x128xf32, #tpu.memory_space<vmem>>, vector<2x128xf32>,
    return
  }
  func.func @transform_0(%arg0: i32) -> (i32, i32) {
    %c0_i32 = arith.constant 0 : i32
    %c0_i32_0 = arith.constant 0 : i32
    return %arg0, %c0_i32 : i32, i32
  }
  func.func @transform_1(%arg0: i32) -> (i32, i32) {
    %c0_i32 = arith.constant 0 : i32
    %c0_i32_0 = arith.constant 0 : i32
    %c0_i32_1 = arith.constant 0 : i32
    return %c0_i32, %c0_i32_0 : i32, i32
  }
  func.func @transform_2(%arg0: i32) -> (i32, i32) {
    %c0_i32 = arith.constant 0 : i32
    %c0_i32_0 = arith.constant 0 : i32
    %c0_i32_1 = arith.constant 0 : i32
    return %c0_i32, %c0_i32_0 : i32, i32
  }
  func.func @transform_3(%arg0: i32) -> (i32, i32) {
    %c0_i32 = arith.constant 0 : i32
    %c0_i32_0 = arith.constant 0 : i32
    %c0_i32_1 = arith.constant 0 : i32
    return %c0_i32, %c0_i32_0 : i32, i32
  }
  func.func @transform_4(%arg0: i32) -> (i32, i32) {
    %c0_i32 = arith.constant 0 : i32
    %c0_i32_0 = arith.constant 0 : i32
    %c0_i32_1 = arith.constant 0 : i32
    return %c0_i32, %c0_i32_0 : i32, i32
  }
  func.func @transform_5(%arg0: i32) -> (i32, i32) {
    %c0_i32 = arith.constant 0 : i32
    %c0_i32_0 = arith.constant 0 : i32
    return %arg0, %c0_i32 : i32, i32
  }
}

</mosaic_0001>

<llo_original>
// kernel: tpu_custom_call.1
$region0: #{tpu_custom_call.1}
  #allocation0 [shape = 'u32[]', space=smem, size = 0x4, offset = 0x4, fixed_abs, tag = 'smem constant byte address 0x4 - core index']
  #allocation1 [shape = 'u32[144,128]{1,0:T(1,128)}', space=vmem, size = 0x12000, scoped, tag = 'internal scratch']
  %s0 = inlined_call_operand.hbm [shape: bf16[2,32], index: 0, kind: input, shape index: {}]
  %s1 = inlined_call_operand.hbm [shape: bf16[32,32], index: 1, kind: input, shape index: {}]
  %s2 = inlined_call_operand.vmem [shape: f32[1,32], index: 2, kind: input, shape index: {}]
  %s3 = inlined_call_operand.hbm [shape: bf16[32,128], index: 3, kind: input, shape index: {}]
  %s4 = inlined_call_operand.vmem [shape: f32[1,128], index: 4, kind: input, shape index: {}]
  %s5 = inlined_call_operand.hbm [shape: f32[2,128], index: 5, kind: output, shape index: {}]
  %s6 = sld [smem:[#allocation0]]
  $region42: #{tpu_custom_call.1} parent=0
    _
  %s8 = ssub.s32 1, %s6
  %s9 = scalar_select 0, %s8, %s6
  $region1: #{tpu_custom_call.1} parent=0
    #allocation2 [shape = 'u8[512]{0}', space=vmem, size = 0x400, scoped, tag = 'input window, operand 0, single buffered']
    #allocation3 [shape = 's32[1]{0}', space=sflag, size = 0x4, scoped, tag = 'scoped memory for tpu_custom_call.1']
    #allocation4 [shape = 's32[1]{0}', space=sflag, size = 0x4, scoped, tag = 'scoped memory for tpu_custom_call.1']
    #allocation5 [shape = 'u8[8192]{0}', space=vmem, size = 0x2000, scoped, tag = 'input window, operand 1, single buffered']
    #allocation6 [shape = 's32[1]{0}', space=sflag, size = 0x4, scoped, tag = 'scoped memory for tpu_custom_call.1']
    #allocation7 [shape = 'u8[8192]{0}', space=vmem, size = 0x2000, scoped, tag = 'input window, operand 3, single buffered']
    #allocation8 [shape = 'u8[1024]{0}', space=vmem, size = 0x400, scoped, tag = 'output window, operand 0, single buffered']
    %10 = vsyncpa [#allocation3], 0
    %11 = vsyncpa [#allocation6], 0
    %12 = vsyncpa [#allocation4], 0
    // Predicated region
    $region2: #{tpu_custom_call.1} parent=1 // pred_check
      _
    $region3: #{tpu_custom_call.1} parent=1 // pred_check_branch
      %14 = sbr.rel (0) target = $region5
    $region4: #{tpu_custom_call.1} parent=1 // pred_region
      %s16 = ssub.s32 16, 16
      %17 = vsyncadd [#allocation3], %s16
      %s19 = sshll.u32 [#allocation2], 4
      %s20 = int_to_ptr.vmem [resolvable:$true] %s19
      %22 = dma.hbm_to_vmem [thread:$0]  %s0, 16, %s20, [#allocation3]
    $region5: #{tpu_custom_call.1} parent=1 // pred_fallthru
      _
    // Predicated region
    $region6: #{tpu_custom_call.1} parent=1 // pred_check
      _
    $region7: #{tpu_custom_call.1} parent=1 // pred_check_branch
      %24 = sbr.rel (0) target = $region9
    $region8: #{tpu_custom_call.1} parent=1 // pred_region
      %s26 = ssub.s32 256, 256
      %27 = vsyncadd [#allocation6], %s26
      %s28 = sshll.u32 [#allocation5], 4
      %s29 = int_to_ptr.vmem [resolvable:$true] %s28
      %34 = dma.hbm_to_vmem [thread:$0]  %s1, 256, %s29, [#allocation6], 64, 64, 4
    $region9: #{tpu_custom_call.1} parent=1 // pred_fallthru
      _
    // Predicated region
    $region10: #{tpu_custom_call.1} parent=1 // pred_check
      _
    $region11: #{tpu_custom_call.1} parent=1 // pred_check_branch
      %36 = sbr.rel (0) target = $region13
    $region12: #{tpu_custom_call.1} parent=1 // pred_region
      _
    $region13: #{tpu_custom_call.1} parent=1 // pred_fallthru
      _
    // Predicated region
    $region14: #{tpu_custom_call.1} parent=1 // pred_check
      _
    $region15: #{tpu_custom_call.1} parent=1 // pred_check_branch
      %38 = sbr.rel (0) target = $region17
    $region16: #{tpu_custom_call.1} parent=1 // pred_region
      %s40 = ssub.s32 256, 256
      %41 = vsyncadd [#allocation6], %s40
      %s42 = sshll.u32 [#allocation7], 4
      %s43 = int_to_ptr.vmem [resolvable:$true] %s42
      %48 = dma.hbm_to_vmem [thread:$0]  %s3, 256, %s43, [#allocation6], 64, 64, 4
    $region17: #{tpu_custom_call.1} parent=1 // pred_fallthru
      _
    // Predicated region
    $region18: #{tpu_custom_call.1} parent=1 // pred_check
      _
    $region19: #{tpu_custom_call.1} parent=1 // pred_check_branch
      %50 = sbr.rel (0) target = $region21
    $region20: #{tpu_custom_call.1} parent=1 // pred_region
      _
    $region21: #{tpu_custom_call.1} parent=1 // pred_fallthru
      _
    // Predicated region
    $region22: #{tpu_custom_call.1} parent=1 // pred_check
      _
    $region23: #{tpu_custom_call.1} parent=1 // pred_check_branch
      %52 = sbr.rel (0) target = $region25
    $region24: #{tpu_custom_call.1} parent=1 // pred_region
      %53 = dma.done [#allocation3], 16
    $region25: #{tpu_custom_call.1} parent=1 // pred_fallthru
      _
    // Predicated region
    $region26: #{tpu_custom_call.1} parent=1 // pred_check
      _
    $region27: #{tpu_custom_call.1} parent=1 // pred_check_branch
      %55 = sbr.rel (0) target = $region29
    $region28: #{tpu_custom_call.1} parent=1 // pred_region
      %56 = dma.done [#allocation6], 256
    $region29: #{tpu_custom_call.1} parent=1 // pred_fallthru
      _
    // Predicated region
    $region30: #{tpu_custom_call.1} parent=1 // pred_check
      _
    $region31: #{tpu_custom_call.1} parent=1 // pred_check_branch
      %58 = sbr.rel (0) target = $region33
    $region32: #{tpu_custom_call.1} parent=1 // pred_region
      %59 = dma.done [#allocation6], 256
    $region33: #{tpu_custom_call.1} parent=1 // pred_fallthru
      _
    %v61 = vld [vmem:[#allocation2] sm:$0x1]
    %v62 = vld [vmem:[#allocation5] sm:$0xf]
    %v63 = vld [vmem:[#allocation5 + $0x4] sm:$0xf]
    %v64 = vld [vmem:[#allocation5 + $0x8] sm:$0xf]
    %v65 = vld [vmem:[#allocation5 + $0xc] sm:$0xf]
    %v66 = vld [vmem:[%s2] sm:$0x1]
    %v68 = vlaneseq
    %v69 = vshrl.u32 %v68, 7
    %v70 = vsub.s32 0, %v69
    %v71 = vrot.slane %v66, %v70
    %v77 = vunpack.c.l.b16 %v62
    %v78 = vunpack.c.l.b16 %v63
    %v79 = vunpack.c.l.b16 %v64
    %v80 = vunpack.c.l.b16 %v65
    %v81 = vpack.c.b16 %v78, %v77
    %v82 = vpack.c.b16 %v80, %v79
    %vm85 = vcmask 261120
    %v87 = vsel %vm85, %v61, 0
    %89 = vmatprep.subr.bf16.mxu0 0
    %90 = vmatpush1.bf16.msra.mxu0 0
    %91 = vmatprep.subr.bf16.mxu0 0
    %92 = vmatpush1.bf16.msra.mxu0 0
    %93 = vmatprep.subr.bf16.mxu0 0
    %94 = vmatpush1.bf16.msra.mxu0 0
    %95 = vmatprep.subr.bf16.mxu0 0
    %96 = vmatpush1.bf16.msra.mxu0 0
    %97 = vmatprep.subr.bf16.mxu0 0
    %98 = vmatpush1.bf16.msra.mxu0 0
    %99 = vmatprep.subr.bf16.mxu0 0
    %100 = vmatpush1.bf16.msra.mxu0 0
    %101 = vmatprep.subr.bf16.mxu0 0
    %102 = vmatpush1.bf16.msra.mxu0 %v82
    %103 = vmatprep.subr.bf16.mxu0 0
    %104 = vmatpush1.bf16.msra.mxu0 %v81
    %105 = vmatprep.subr.bf16.mxu0 0
    %106 = vmatpush2.bf16.msra.mxu0 0
    %107 = vmatprep.subr.bf16.mxu0 0
    %108 = vmatpush2.bf16.msra.mxu0 0
    %109 = vmatprep.subr.bf16.mxu0 0
    %110 = vmatpush2.bf16.msra.mxu0 0
    %111 = vmatprep.subr.bf16.mxu0 0
    %112 = vmatpush2.bf16.msra.mxu0 0
    %113 = vmatprep.subr.bf16.mxu0 0
    %114 = vmatpush2.bf16.msra.mxu0 0
    %115 = vmatprep.subr.bf16.mxu0 0
    %116 = vmatpush2.bf16.msra.mxu0 0
    %117 = vmatprep.subr.bf16.mxu0 0
    %118 = vmatpush2.bf16.msra.mxu0 0
    %119 = vmatprep.subr.bf16.mxu0 0
    %120 = vmatpush2.bf16.msra.mxu0 0
    %121 = vmatprep.mubr.bf16.mxu0 0
    %122 = vmatmul.mubr.bf16.gmra.mxu0 %v87
    %v123 = vpop.f32.mrf.mxu0
    %v124 = vadd.f32 %v71, %v123
    %v125 = vpop.f32.mrf.mxu0
    %v126 = vpop.f32.mrf.mxu0
    %v127 = vpop.f32.mrf.mxu0
    %128 = vdwg.mxu0
    %v129 = vpack.c.bf16 %v124, %v124
    %v130 = vtanh.bf16.pop %v129
    %v131 = vld [vmem:[#allocation7] sm:$0xf]
    %v132 = vld [vmem:[#allocation7 + $0x4] sm:$0xf]
    %v133 = vld [vmem:[#allocation7 + $0x8] sm:$0xf]
    %v134 = vld [vmem:[#allocation7 + $0xc] sm:$0xf]
    %v135 = vld [vmem:[%s4] sm:$0x1]
    %v137 = vlaneseq
    %v138 = vshrl.u32 %v137, 7
    %v139 = vsub.s32 0, %v138
    %v140 = vrot.slane %v135, %v139
    %v146 = vunpack.c.l.b16 %v131
    %v147 = vunpack.c.l.b16 %v132
    %v148 = vunpack.c.l.b16 %v133
    %v149 = vunpack.c.l.b16 %v134
    %v150 = vpack.c.b16 %v147, %v146
    %v151 = vpack.c.b16 %v149, %v148
    %v155 = vsel %vm85, %v130, 0
    %157 = vmatprep.subr.bf16.mxu0 0
    %158 = vmatpush1.bf16.msra.mxu0 0
    %159 = vmatprep.subr.bf16.mxu0 0
    %160 = vmatpush1.bf16.msra.mxu0 0
    %161 = vmatprep.subr.bf16.mxu0 0
    %162 = vmatpush1.bf16.msra.mxu0 0
    %163 = vmatprep.subr.bf16.mxu0 0
    %164 = vmatpush1.bf16.msra.mxu0 0
    %165 = vmatprep.subr.bf16.mxu0 0
    %166 = vmatpush1.bf16.msra.mxu0 0
    %167 = vmatprep.subr.bf16.mxu0 0
    %168 = vmatpush1.bf16.msra.mxu0 0
    %169 = vmatprep.subr.bf16.mxu0 0
    %170 = vmatpush1.bf16.msra.mxu0 %v151
    %171 = vmatprep.subr.bf16.mxu0 0
    %172 = vmatpush1.bf16.msra.mxu0 %v150
    %173 = vmatprep.subr.bf16.mxu0 0
    %174 = vmatpush2.bf16.msra.mxu0 0
    %175 = vmatprep.subr.bf16.mxu0 0
    %176 = vmatpush2.bf16.msra.mxu0 0
    %177 = vmatprep.subr.bf16.mxu0 0
    %178 = vmatpush2.bf16.msra.mxu0 0
    %179 = vmatprep.subr.bf16.mxu0 0
    %180 = vmatpush2.bf16.msra.mxu0 0
    %181 = vmatprep.subr.bf16.mxu0 0
    %182 = vmatpush2.bf16.msra.mxu0 0
    %183 = vmatprep.subr.bf16.mxu0 0
    %184 = vmatpush2.bf16.msra.mxu0 0
    %185 = vmatprep.subr.bf16.mxu0 0
    %186 = vmatpush2.bf16.msra.mxu0 0
    %187 = vmatprep.subr.bf16.mxu0 0
    %188 = vmatpush2.bf16.msra.mxu0 0
    %189 = vmatprep.mubr.bf16.mxu0 0
    %190 = vmatmul.mubr.bf16.gmra.mxu0 %v155
    %v191 = vpop.f32.mrf.mxu0
    %v192 = vadd.f32 %v140, %v191
    %v193 = vpop.f32.mrf.mxu0
    %v194 = vpop.f32.mrf.mxu0
    %v195 = vpop.f32.mrf.mxu0
    %196 = vdwg.mxu0
    %197 = vst [vmem:[#allocation8] sm:$0x3] %v192
    // Predicated region
    $region34: #{tpu_custom_call.1} parent=1 // pred_check
      _
    $region35: #{tpu_custom_call.1} parent=1 // pred_check_branch
      %199 = sbr.rel (0) target = $region37
    $region36: #{tpu_custom_call.1} parent=1 // pred_region
      %s201 = ssub.s32 32, 32
      %202 = vsyncadd [#allocation4], %s201
      %s204 = sshll.u32 [#allocation8], 4
      %s205 = int_to_ptr.vmem [resolvable:$true] %s204
      %207 = dma.vmem_to_hbm [thread:$0]  %s205, 32, %s5, [#allocation4]
    $region37: #{tpu_custom_call.1} parent=1 // pred_fallthru
      _
    // Predicated region
    $region38: #{tpu_custom_call.1} parent=1 // pred_check
      _
    $region39: #{tpu_custom_call.1} parent=1 // pred_check_branch
      %209 = sbr.rel (0) target = $region41
    $region40: #{tpu_custom_call.1} parent=1 // pred_region
      %210 = dma.done [#allocation4], 32
    $region41: #{tpu_custom_call.1} parent=1 // pred_fallthru
      _
    %211 = vsyncpa [#allocation3], 1
    %212 = vsyncpa [#allocation6], 1
    %213 = vsyncpa [#allocation4], 1

</llo_original>
